<compile_context>
chip_gen: v5e
topology: v5e:2x2
jax: 0.10.0
libtpu: 0.0.40
codegen_flags: <defaults>
</compile_context>

<pallas_src>
import jax
import jax.numpy as jnp
from jax.experimental import pallas as pl
from jax.experimental.pallas import tpu as pltpu

_NEG_PAD = -1e30  # bias for padded classes: exp(_NEG_PAD - max) == 0.0 exactly in f32


def _round_up(x, m):
    return (x + m - 1) // m * m


def _vmem_capacity_bytes():
    """Physical per-core VMEM (128 MiB on v5e/v6e, 64 MiB on v7x)."""
    try:
        info = pltpu.get_tpu_info()
        for attr in ("vmem_capacity_bytes", "vmem_size_bytes"):
            cap = getattr(info, attr, None)
            if cap:
                return int(cap)
    except Exception:
        pass
    return 64 * 1024 * 1024  # conservative fallback (v7x-sized)


def _choose_tiles(bp8, t, d, x_item, cp, out_item, budget, with_labels):
    """Pick (tile_b, tile_t) so the full double-buffered working set fits `budget`."""
    fixed = 2 * d * cp * 4            # weight block (constant index, still double-buffered)
    fixed += 2 * 8 * cp * 4           # bias block (sublane-padded to 8 rows)
    fixed += 512 * 1024               # headroom: semaphores / compiler-internal scratch

    def per_row(tile_t):
        r = 2 * tile_t * d * x_item   # x block, double-buffered (dominant term)
        r += 2 * 2 * cp * out_item    # logits + probs output blocks, double-buffered
        r += d * 4                    # encoder-sum scratch (single copy, f32)
        if with_labels:
            r += 2 * 128 * 4          # labels (tb, 1) block, lane-padded, double-buffered
            r += 2 * 128 * 4          # per-row NLL (tb, 1) output block, lane-padded
        return r

    avail = budget - fixed
    # Prefer a full-T batch tile: fewest grid steps, biggest contiguous DMAs.
    tb = (min(avail // max(per_row(t), 1), bp8) // 8) * 8
    if tb >= 8:
        return int(tb), int(t)
    # Even 8 rows at full T do not fit (huge T*D, e.g. real ELMo shapes on v7x's
    # 64 MiB VMEM): keep tb = 8 and chunk the token axis instead.
    tb = 8
    tt = (avail - tb * per_row(0)) // max(tb * 2 * d * x_item, 1)
    tt = int(t) if tt >= t else max(8, (int(tt) // 8) * 8)
    return tb, tt


def _finalize(enc_ref, wt_ref, b_ref, logits_ref, probs_ref):
    """Linear + numerically stable softmax on the accumulated encoding."""
    logits = jnp.dot(enc_ref[...], wt_ref[...],
                     preferred_element_type=jnp.float32) + b_ref[...]     # [tb, Cp]
    logits_ref[...] = logits.astype(logits_ref.dtype)
    m = jnp.max(logits, axis=1, keepdims=True)                            # [tb, 1]
    e = jnp.exp(logits - m)                                               # [tb, Cp]
    s = jnp.sum(e, axis=1, keepdims=True)                                 # [tb, 1]
    # approx=True -> EUP reciprocal (otherwise-idle slot); exact divide not needed.
    probs_ref[...] = (e * pl.reciprocal(s, approx=True)).astype(probs_ref.dtype)
    return logits, m, s


def _infer_kernel(x_ref, wt_ref, b_ref, logits_ref, probs_ref, enc_ref):
    t = pl.program_id(1)

    @pl.when(t == 0)
    def _():
        enc_ref[...] = jnp.zeros_like(enc_ref)

    # Accumulate the bag-of-words token sum in f32 without materializing a full
    # f32 copy of the (possibly bf16) x tile.
    enc_ref[...] += jnp.sum(x_ref[...], axis=1, dtype=jnp.float32)

    @pl.when(t == pl.num_programs(1) - 1)
    def _():
        _finalize(enc_ref, wt_ref, b_ref, logits_ref, probs_ref)


def _train_kernel(x_ref, wt_ref, b_ref, lab_ref, logits_ref, probs_ref, nll_ref,
                  enc_ref):
    t = pl.program_id(1)

    @pl.when(t == 0)
    def _():
        enc_ref[...] = jnp.zeros_like(enc_ref)

    enc_ref[...] += jnp.sum(x_ref[...], axis=1, dtype=jnp.float32)

    @pl.when(t == pl.num_programs(1) - 1)
    def _():
        logits, m, s = _finalize(enc_ref, wt_ref, b_ref, logits_ref, probs_ref)
        # Per-row negative log-likelihood.  Padded batch rows carry label == -1
        # and padded classes never match a real label, so both contribute 0.
        log_probs = (logits - m) - jnp.log(s)                             # [tb, Cp]
        tb, cp = logits.shape
        one_hot = jax.lax.broadcasted_iota(jnp.int32, (tb, cp), 1) == lab_ref[...]
        nll_ref[...] = -jnp.sum(jnp.where(one_hot, log_probs, 0.0),
                                axis=1, keepdims=True)                    # [tb, 1]


def bow_elmo_linear_classifier(x, weight, bias, labels=None, *,
                               tile_b=None, tile_t=None,
                               out_dtype=jnp.float32):
    """Fused forward: mean-pool encoder + linear + softmax (+ cross-entropy).

    x:        [B, T, D] float32 or bfloat16 (per-token ELMo representations;
              bfloat16 recommended for large T*D -- halves the dominant HBM stream)
    weight:   [C, D]    float32             (nn.Linear weight)
    bias:     [C]       float32             (nn.Linear bias)
    labels:   [B]       int32 or None       (None => test path, no loss)
    out_dtype: dtype of logits / normalized_probs outputs (f32 default; bf16 halves
               the padded output writeback for bandwidth-bound configs).
    returns   dict(logits [B,C], normalized_probs [B,C][, loss scalar])
    """
    B, T, D = x.shape
    C = weight.shape[0]
    compute_loss = labels is not None
    x_item = jnp.dtype(x.dtype).itemsize
    out_item = jnp.dtype(out_dtype).itemsize

    Cp = _round_up(C, 128)        # lane-dense class dim
    Bp8 = _round_up(B, 8)

    cap = _vmem_capacity_bytes()
    budget = int(cap * 0.75)      # ~96 MiB usable on v5e/v6e, ~48 MiB on v7x

    tb, tT = _choose_tiles(Bp8, T, D, x_item, Cp, out_item, budget, compute_loss)
    if tile_b is not None:
        tb = max(8, _round_up(min(tile_b, Bp8), 8))
    if tile_t is not None:
        tT = T if tile_t >= T else max(8, (tile_t // 8) * 8)

    Bp = _round_up(B, tb)
    Tp = _round_up(T, tT)
    grid = (Bp // tb, Tp // tT)

    # Glue (one-time per call): weight pre-transposed with the 1/T mean scale
    # folded in and classes zero-padded; padded classes get a huge negative bias.
    wt = jnp.zeros((D, Cp), jnp.float32).at[:, :C].set(weight.T.astype(jnp.float32) / T)
    b2 = jnp.full((1, Cp), _NEG_PAD, jnp.float32).at[0, :C].set(bias.astype(jnp.float32))

    x_p = x
    if Bp != B or Tp != T:
        # Zero token padding contributes exactly 0 to the bag-of-words sum.
        x_p = jnp.pad(x, ((0, Bp - B), (0, Tp - T), (0, 0)))

    # VMEM estimate: double buffers for EVERY BlockSpec operand + the scratch.
    est = (2 * tb * tT * D * x_item          # x tile
           + 2 * D * Cp * 4                  # weight (constant index, still x2)
           + 2 * 8 * Cp * 4                  # bias (sublane-padded)
           + 2 * 2 * tb * Cp * out_item      # logits + probs tiles
           + tb * D * 4)                     # encoder-sum scratch
    if compute_loss:
        est += 2 * tb * 128 * 4 + 2 * tb * 128 * 4   # labels + per-row NLL (lane-padded)
    vmem_limit = int(min(max(est * 5 // 4 + (1 << 20), 16 * 1024 * 1024), cap))

    # Advisory cost estimate so XLA schedules neighbours around this
    # bandwidth-heavy custom call.
    cost = pl.CostEstimate(
        flops=int(Bp * Tp * D + 2 * Bp * D * Cp + 6 * Bp * Cp),
        transcendentals=int(Bp * Cp + 2 * Bp),
        bytes_accessed=int(Bp * Tp * D * x_item + D * Cp * 4 + Cp * 4
                           + 2 * Bp * Cp * out_item
                           + (8 * Bp if compute_loss else 0)))

    params = pltpu.CompilerParams(
        dimension_semantics=("parallel", "arbitrary"),  # batch tiles independent,
        vmem_limit_bytes=vmem_limit)                    # token chunks accumulate

    x_spec = pl.BlockSpec((tb, tT, D), lambda i, t: (i, t, 0))
    wt_spec = pl.BlockSpec((D, Cp), lambda i, t: (0, 0))
    b_spec = pl.BlockSpec((1, Cp), lambda i, t: (0, 0))
    out_bc = pl.BlockSpec((tb, Cp), lambda i, t: (i, 0))
    scratch = [pltpu.VMEM((tb, D), jnp.float32)]

    if compute_loss:
        lab = jnp.full((Bp, 1), -1, jnp.int32).at[:B, 0].set(labels.astype(jnp.int32))
        grid_spec = pltpu.PrefetchScalarGridSpec(
            num_scalar_prefetch=0, grid=grid,
            in_specs=[x_spec, wt_spec, b_spec,
                      pl.BlockSpec((tb, 1), lambda i, t: (i, 0))],
            out_specs=(out_bc, out_bc,
                       pl.BlockSpec((tb, 1), lambda i, t: (i, 0))),
            scratch_shapes=scratch)
        out_shape = (jax.ShapeDtypeStruct((Bp, Cp), out_dtype),
                     jax.ShapeDtypeStruct((Bp, Cp), out_dtype),
                     jax.ShapeDtypeStruct((Bp, 1), jnp.float32))
        logits_p, probs_p, nll = pl.pallas_call(
            _train_kernel, out_shape=out_shape, grid_spec=grid_spec,
            compiler_params=params, cost_estimate=cost)(x_p, wt, b2, lab)
        # CrossEntropyLoss mean reduction; padded batch rows contribute exactly 0.
        loss = jnp.sum(nll) / jnp.float32(B)
        return {"logits": logits_p[:B, :C],
                "normalized_probs": probs_p[:B, :C],
                "loss": loss}
    else:
        grid_spec = pltpu.PrefetchScalarGridSpec(
            num_scalar_prefetch=0, grid=grid,
            in_specs=[x_spec, wt_spec, b_spec],
            out_specs=(out_bc, out_bc),
            scratch_shapes=scratch)
        out_shape = (jax.ShapeDtypeStruct((Bp, Cp), out_dtype),
                     jax.ShapeDtypeStruct((Bp, Cp), out_dtype))
        logits_p, probs_p = pl.pallas_call(
            _infer_kernel, out_shape=out_shape, grid_spec=grid_spec,
            compiler_params=params, cost_estimate=cost)(x_p, wt, b2)
        return {"logits": logits_p[:B, :C],
                "normalized_probs": probs_p[:B, :C]}


def _reference(x, weight, bias, labels):
    enc = jnp.mean(x.astype(jnp.float32), axis=1)
    logits = enc @ weight.T + bias
    probs = jax.nn.softmax(logits, axis=1)
    logp = jax.nn.log_softmax(logits, axis=1)
    loss = -jnp.mean(jnp.take_along_axis(logp, labels[:, None], axis=1))
    return logits, probs, loss


if __name__ == "__main__":
    # Small shapes consistent with the forward pass.  B is not a tile multiple
    # (exercises the batch padding / label-masking path) and T is larger than the
    # explicit token chunk (exercises the token-chunk accumulation path).
    B, T, D, C = 12, 16, 128, 4       # batch, tokens, encoding_dim, num_classes

    key = jax.random.PRNGKey(0)
    kx, kw, kb, kl = jax.random.split(key, 4)

    x = jax.random.normal(kx, (B, T, D), dtype=jnp.float32)
    bound = 1.0 / (D ** 0.5)
    weight = jax.random.uniform(kw, (C, D), minval=-bound, maxval=bound,
                                dtype=jnp.float32)
    bias = jax.random.uniform(kb, (C,), minval=-bound, maxval=bound,
                              dtype=jnp.float32)
    labels = jax.random.randint(kl, (B,), 0, C, dtype=jnp.int32)

    ref_logits, ref_probs, ref_loss = _reference(x, weight, bias, labels)

    # ---- training / validation path, f32 activations, grid (2, 2) ----
    out = jax.block_until_ready(
        bow_elmo_linear_classifier(x, weight, bias, labels, tile_b=8, tile_t=8))
    assert jnp.allclose(out["logits"], ref_logits, atol=1e-5, rtol=1e-5)
    assert jnp.allclose(out["normalized_probs"], ref_probs, atol=5e-3, rtol=5e-3)
    assert jnp.allclose(out["loss"], ref_loss, atol=1e-5, rtol=1e-5)
    assert abs(float(jnp.sum(out["normalized_probs"])) - B) < 0.1  # padded classes == 0

    # ---- training path with bf16 activations (recommended default for large T*D) ----
    x_bf16 = x.astype(jnp.bfloat16)
    rb_logits, rb_probs, rb_loss = _reference(x_bf16, weight, bias, labels)
    out_bf = jax.block_until_ready(
        bow_elmo_linear_classifier(x_bf16, weight, bias, labels, tile_b=8, tile_t=8))
    assert jnp.allclose(out_bf["logits"], rb_logits, atol=2e-3, rtol=2e-3)
    assert jnp.allclose(out_bf["loss"], rb_loss, atol=2e-3, rtol=2e-3)

    # ---- test path (no labels / no loss), tiles auto-derived from the VMEM budget ----
    out_t = jax.block_until_ready(
        bow_elmo_linear_classifier(x_bf16, weight, bias, labels=None))
    assert jnp.allclose(out_t["logits"], rb_logits, atol=2e-3, rtol=2e-3)
    assert jnp.allclose(out_t["normalized_probs"], rb_probs, atol=5e-3, rtol=5e-3)

    print("KERNEL_OK")
</pallas_src>

<mosaic_0001>
module attributes {stable_mosaic.version = 11 : i64} {
  func.func @_train_kernel(%arg0: i32, %arg1: i32, %arg2: memref<8x8x128xf32, #tpu.memory_space<vmem>>, %arg3: memref<128x128xf32, #tpu.memory_space<vmem>>, %arg4: memref<1x128xf32, #tpu.memory_space<vmem>>, %arg5: memref<8x1xi32, #tpu.memory_space<vmem>>, %arg6: memref<8x128xf32, #tpu.memory_space<vmem>>, %arg7: memref<8x128xf32, #tpu.memory_space<vmem>>, %arg8: memref<8x1xf32, #tpu.memory_space<vmem>>, %arg9: memref<8x128xf32, #tpu.memory_space<vmem>>) attributes {dimension_semantics = [#tpu.dimension_semantics<parallel>, #tpu.dimension_semantics<arbitrary>], iteration_bounds = array<i64: 2, 2>, scalar_prefetch = 0 : i64, scratch_operands = 1 : i64, tpu.core_type = #tpu.core_type<tc>, window_params = [{transform_indices = @transform_0, window_bounds = array<i64: 8, 8, 128>}, {pipeline_mode = #tpu.pipeline_mode<synchronous>, transform_indices = @transform_1, window_bounds = array<i64: 128, 128>}, {pipeline_mode = #tpu.pipeline_mode<synchronous>, transform_indices = @transform_2, window_bounds = array<i64: 1, 128>}, {transform_indices = @transform_3, window_bounds = array<i64: 8, 1>}, {transform_indices = @transform_4, window_bounds = array<i64: 8, 128>}, {transform_indices = @transform_5, window_bounds = array<i64: 8, 128>}, {transform_indices = @transform_6, window_bounds = array<i64: 8, 1>}]} {
    %c0_i32 = arith.constant 0 : i32
    %0 = arith.cmpi eq, %arg1, %c0_i32 : i32
    %1 = arith.extui %0 : i1 to i32
    %c0_i32_0 = arith.constant 0 : i32
    %2 = arith.cmpi ne, %1, %c0_i32_0 : i32
    scf.if %2 {
      %cst_8 = arith.constant 0.000000e+00 : f32
      %11 = vector.broadcast %cst_8 : f32 to vector<8x128xf32>
      %c0_9 = arith.constant 0 : index
      %c0_10 = arith.constant 0 : index
      %12 = vector.load %arg9[%c0_9, %c0_10] : memref<8x128xf32, #tpu.memory_space<vmem>>, vector<8x128xf32>
      tpu.vector_store %arg9[%c0_9, %c0_10], %11 {strides = array<i32>} : memref<8x128xf32, #tpu.memory_space<vmem>>, vector<8x128xf32>,
    } else {
    }
    %c0 = arith.constant 0 : index
    %c0_1 = arith.constant 0 : index
    %3 = vector.load %arg9[%c0, %c0_1] : memref<8x128xf32, #tpu.memory_space<vmem>>, vector<8x128xf32>
    %c0_2 = arith.constant 0 : index
    %c0_3 = arith.constant 0 : index
    %c0_4 = arith.constant 0 : index
    %4 = vector.load %arg2[%c0_2, %c0_3, %c0_4] : memref<8x8x128xf32, #tpu.memory_space<vmem>>, vector<8x8x128xf32>
    %cst = arith.constant dense<0.000000e+00> : vector<8x128xf32>
    %5 = vector.multi_reduction <add>, %4, %cst [1] : vector<8x8x128xf32> to vector<8x128xf32>
    %6 = arith.addf %3, %5 : vector<8x128xf32>
    %c0_5 = arith.constant 0 : index
    %c0_6 = arith.constant 0 : index
    %7 = vector.load %arg9[%c0_5, %c0_6] : memref<8x128xf32, #tpu.memory_space<vmem>>, vector<8x128xf32>
    tpu.vector_store %arg9[%c0_5, %c0_6], %6 {strides = array<i32>} : memref<8x128xf32, #tpu.memory_space<vmem>>, vector<8x128xf32>,
    %c1_i32 = arith.constant 1 : i32
    %8 = arith.cmpi eq, %arg1, %c1_i32 : i32
    %9 = arith.extui %8 : i1 to i32
    %c0_i32_7 = arith.constant 0 : i32
    %10 = arith.cmpi ne, %9, %c0_i32_7 : i32
    scf.if %10 {
      %c0_8 = arith.constant 0 : index
      %c0_9 = arith.constant 0 : index
      %11 = vector.load %arg9[%c0_8, %c0_9] : memref<8x128xf32, #tpu.memory_space<vmem>>, vector<8x128xf32>
      %c0_10 = arith.constant 0 : index
      %c0_11 = arith.constant 0 : index
      %12 = vector.load %arg3[%c0_10, %c0_11] : memref<128x128xf32, #tpu.memory_space<vmem>>, vector<128x128xf32>
      %cst_12 = arith.constant dense<0.000000e+00> : vector<8x128xf32>
      %13 = tpu.matmul %11, %12, %cst_12 {dimension_numbers = #tpu.dot_dimension_numbers<[1], [0], [0], [1], [0, 0, 1, 1], [], []>} : vector<8x128xf32>, vector<128x128xf32>, vector<8x128xf32> -> vector<8x128xf32>
      %c0_13 = arith.constant 0 : index
      %c0_14 = arith.constant 0 : index
      %14 = vector.load %arg4[%c0_13, %c0_14] : memref<1x128xf32, #tpu.memory_space<vmem>>, vector<1x128xf32>
      %15 = vector.broadcast %14 : vector<1x128xf32> to vector<8x128xf32>
      %16 = arith.addf %13, %15 : vector<8x128xf32>
      %c0_15 = arith.constant 0 : index
      %c0_16 = arith.constant 0 : index
      %17 = vector.load %arg6[%c0_15, %c0_16] : memref<8x128xf32, #tpu.memory_space<vmem>>, vector<8x128xf32>
      tpu.vector_store %arg6[%c0_15, %c0_16], %16 {strides = array<i32>} : memref<8x128xf32, #tpu.memory_space<vmem>>, vector<8x128xf32>,
      %cst_17 = arith.constant dense<0xFF800000> : vector<8xf32>
      %18 = vector.multi_reduction <maximumf>, %16, %cst_17 [1] : vector<8x128xf32> to vector<8xf32>
      %19 = vector.shape_cast %18 : vector<8xf32> to vector<8x1xf32>
      %20 = vector.broadcast %19 : vector<8x1xf32> to vector<8x128xf32>
      %21 = arith.subf %16, %20 : vector<8x128xf32>
      %22 = math.exp %21 : vector<8x128xf32>
      %cst_18 = arith.constant dense<0.000000e+00> : vector<8xf32>
      %23 = vector.multi_reduction <add>, %22, %cst_18 [1] : vector<8x128xf32> to vector<8xf32>
      %24 = vector.shape_cast %23 : vector<8xf32> to vector<8x1xf32>
      %25 = tpu.reciprocal %24 {approx = true} : vector<8x1xf32> -> vector<8x1xf32>
      %26 = vector.broadcast %25 : vector<8x1xf32> to vector<8x128xf32>
      %27 = arith.mulf %22, %26 : vector<8x128xf32>
      %c0_19 = arith.constant 0 : index
      %c0_20 = arith.constant 0 : index
      %28 = vector.load %arg7[%c0_19, %c0_20] : memref<8x128xf32, #tpu.memory_space<vmem>>, vector<8x128xf32>
      tpu.vector_store %arg7[%c0_19, %c0_20], %27 {strides = array<i32>} : memref<8x128xf32, #tpu.memory_space<vmem>>, vector<8x128xf32>,
      %29 = vector.broadcast %19 : vector<8x1xf32> to vector<8x128xf32>
      %30 = arith.subf %16, %29 : vector<8x128xf32>
      %31 = math.log %24 : vector<8x1xf32>
      %32 = vector.broadcast %31 : vector<8x1xf32> to vector<8x128xf32>
      %33 = arith.subf %30, %32 : vector<8x128xf32>
      %34 = tpu.iota {dimensions = array<i32: 1>} : vector<8x128xi32>
      %c0_21 = arith.constant 0 : index
      %c0_22 = arith.constant 0 : index
      %35 = vector.load %arg5[%c0_21, %c0_22] : memref<8x1xi32, #tpu.memory_space<vmem>>, vector<8x1xi32>
      %36 = vector.broadcast %35 : vector<8x1xi32> to vector<8x128xi32>
      %37 = arith.cmpi eq, %34, %36 : vector<8x128xi32>
      %cst_23 = arith.constant 0.000000e+00 : f32
      %38 = vector.broadcast %cst_23 : f32 to vector<8x128xf32>
      %39 = arith.select %37, %33, %38 : vector<8x128xi1>, vector<8x128xf32>
      %cst_24 = arith.constant dense<0.000000e+00> : vector<8xf32>
      %40 = vector.multi_reduction <add>, %39, %cst_24 [1] : vector<8x128xf32> to vector<8xf32>
      %41 = vector.shape_cast %40 : vector<8xf32> to vector<8x1xf32>
      %cst_25 = arith.constant 0.000000e+00 : f32
      %42 = vector.broadcast %cst_25 : f32 to vector<8x1xf32>
      %43 = arith.subf %42, %41 : vector<8x1xf32>
      %c0_26 = arith.constant 0 : index
      %c0_27 = arith.constant 0 : index
      %44 = vector.load %arg8[%c0_26, %c0_27] : memref<8x1xf32, #tpu.memory_space<vmem>>, vector<8x1xf32>
      tpu.vector_store %arg8[%c0_26, %c0_27], %43 {strides = array<i32>} : memref<8x1xf32, #tpu.memory_space<vmem>>, vector<8x1xf32>,
    } else {
    }
    return
  }
  func.func @transform_0(%arg0: i32, %arg1: i32) -> (i32, i32, i32) {
    %c0_i32 = arith.constant 0 : i32
    %c0_i32_0 = arith.constant 0 : i32
    return %arg0, %arg1, %c0_i32 : i32, i32, i32
  }
  func.func @transform_1(%arg0: i32, %arg1: i32) -> (i32, i32) {
    %c0_i32 = arith.constant 0 : i32
    %c0_i32_0 = arith.constant 0 : i32
    %c0_i32_1 = arith.constant 0 : i32
    return %c0_i32, %c0_i32_0 : i32, i32
  }
  func.func @transform_2(%arg0: i32, %arg1: i32) -> (i32, i32) {
    %c0_i32 = arith.constant 0 : i32
    %c0_i32_0 = arith.constant 0 : i32
    %c0_i32_1 = arith.constant 0 : i32
    return %c0_i32, %c0_i32_0 : i32, i32
  }
  func.func @transform_3(%arg0: i32, %arg1: i32) -> (i32, i32) {
    %c0_i32 = arith.constant 0 : i32
    %c0_i32_0 = arith.constant 0 : i32
    return %arg0, %c0_i32 : i32, i32
  }
  func.func @transform_4(%arg0: i32, %arg1: i32) -> (i32, i32) {
    %c0_i32 = arith.constant 0 : i32
    %c0_i32_0 = arith.constant 0 : i32
    return %arg0, %c0_i32 : i32, i32
  }
  func.func @transform_5(%arg0: i32, %arg1: i32) -> (i32, i32) {
    %c0_i32 = arith.constant 0 : i32
    %c0_i32_0 = arith.constant 0 : i32
    return %arg0, %c0_i32 : i32, i32
  }
  func.func @transform_6(%arg0: i32, %arg1: i32) -> (i32, i32) {
    %c0_i32 = arith.constant 0 : i32
    %c0_i32_0 = arith.constant 0 : i32
    return %arg0, %c0_i32 : i32, i32
  }
}

</mosaic_0001>

<llo_original>
// kernel: tpu_custom_call.1
$region0: #{tpu_custom_call.1}
  #allocation0 [shape = 'u32[]', space=smem, size = 0x4, offset = 0x4, fixed_abs, tag = 'smem constant byte address 0x4 - core index']
  #allocation1 [shape = 'u32[72,128]{1,0:T(1,128)}', space=vmem, size = 0x9000, scoped, tag = 'internal scratch']
  #allocation2 [shape = 'f32[8,128]{1,0:T(8,128)}', space=vmem, size = 0x1000, scoped, tag = 'scratch operand']
  %s0 = inlined_call_operand.hbm [shape: f32[16,16,128], index: 0, kind: input, shape index: {}]
  %s1 = inlined_call_operand.hbm [shape: f32[128,128], index: 1, kind: input, shape index: {}]
  %s2 = inlined_call_operand.vmem [shape: f32[1,128], index: 2, kind: input, shape index: {}]
  %s3 = inlined_call_operand.vmem [shape: s32[16,1], index: 3, kind: input, shape index: {}]
  %s4 = inlined_call_operand.hbm [shape: f32[16,128], index: 4, kind: output, shape index: {0}]
  %s5 = inlined_call_operand.hbm [shape: f32[16,128], index: 5, kind: output, shape index: {1}]
  %s6 = inlined_call_operand.vmem [shape: f32[16,1], index: 6, kind: output, shape index: {2}]
  %7 = xla_tuple %s4, %s5, %s6
  %s8 = sld [smem:[#allocation0]]
  $region81: #{tpu_custom_call.1} parent=0
    _
  %s10 = ssub.s32 1, %s8
  %s11 = scalar_select 0, %s10, %s8
  $region1: #{tpu_custom_call.1} parent=0
    #allocation3 [shape = 'u8[65536]{0}', space=vmem, size = 0x10000, scoped, tag = 'input window, operand 0']
    #allocation4 [shape = 's32[2]{0}', space=sflag, size = 0x8, scoped, tag = 'scoped memory for tpu_custom_call.1']
    #allocation5 [shape = 's32[2]{0}', space=sflag, size = 0x8, scoped, tag = 'scoped memory for tpu_custom_call.1']
    #allocation6 [shape = 'u8[65536]{0}', space=vmem, size = 0x10000, scoped, tag = 'input window, operand 1, single buffered']
    #allocation7 [shape = 's32[1]{0}', space=sflag, size = 0x4, scoped, tag = 'scoped memory for tpu_custom_call.1']
    #allocation8 [shape = 'u8[8192]{0}', space=vmem, size = 0x2000, scoped, tag = 'output window, operand 0']
    #allocation9 [shape = 'u8[8192]{0}', space=vmem, size = 0x2000, scoped, tag = 'output window, operand 1']
    #allocation10 [shape = 's32[2]{0}', space=sflag, size = 0x8, scoped, tag = 'scoped memory for tpu_custom_call.1']
    %12 = vsyncpa [#allocation4], 0
    %s13 = scalar_lea.sflag [#allocation4], 1
    %14 = vsyncpa %s13, 0
    %15 = vsyncpa [#allocation7], 0
    %16 = vsyncpa [#allocation5], 0
    %s17 = scalar_lea.sflag [#allocation5], 1
    %18 = vsyncpa %s17, 0
    %19 = vsyncpa [#allocation10], 0
    %s20 = scalar_lea.sflag [#allocation10], 1
    %21 = vsyncpa %s20, 0
    loop: start=0, step=1, limit=6
    $region2: #{tpu_custom_call.1} parent=1 // loop_pre_header
      _
    $region3: #{tpu_custom_call.1} parent=1 // loop_header
      %s23 = sphi 0, %s27
      %p24 = scmp.ge.s32.totalorder %s23, 6
      %s30 = sphi 0, %s42
      %s31 = sphi 0, %s38
      %s32 = sphi 0, %s30
      %s33 = sphi 0, %s31
      %s34 = sphi 0, %s32
      %s35 = sphi 0, %s33
      %s47 = sphi 0, %s49
      %s50 = sphi 0, %s47
      %s51 = sphi 0, %s50
      %s67 = sphi 0, %s51
      %s71 = sphi 0, %s71
      %s73 = sphi 0, %s71
      %s74 = sphi 0, %s73
      %s88 = sphi 0, %s74
      %s92 = sphi 0, %s92
      %s94 = sphi 0, %s92
      %s95 = sphi 0, %s94
      %s109 = sphi 0, %s95
      %s115 = sphi 0, %s117
      %s118 = sphi 0, %s115
      %s119 = sphi 0, %s118
      %s135 = sphi 0, %s119
      %s141 = sphi 0, %s143
      %s144 = sphi 0, %s141
      %s145 = sphi 0, %s144
      %s161 = sphi 0, %s145
      %s167 = sphi 0, %s169
      %s170 = sphi 0, %s167
      %s171 = sphi 0, %s170
      %s187 = sphi 0, %s171
      %s193 = sphi 0, %s195
      %s196 = sphi 0, %s193
      %s197 = sphi 0, %s196
      %s213 = sphi 0, %s197
    $region4: #{tpu_custom_call.1} parent=1 // loop_header_branch
      %26 = sbr.rel (%p24) target = $region8
    $region5: #{tpu_custom_call.1} parent=1 // loop_body
      %s28 = ssub.s32 %s23, 1
      %s29 = ssub.s32 %s23, 2
      %s36 = sadd.s32 1, %s31
      %p37 = scmp.ge.s32.totalorder %s36, 2
      %s38 = scalar_select %p37, 0, %s36
      %s39 = sadd.s32 1, %s30
      %s40 = scalar_select %p37, %s39, %s30
      %p41 = scmp.ge.s32.totalorder %s40, 2
      %s42 = scalar_select %p41, 0, %s40
      %s43 = ssub.s32 %s30, %s42
      %s44 = ssub.s32 %s31, %s38
      %s45 = sor.u32 %s43, %s44
      %p46 = scmp.eq.s32.totalorder %s45, 0
      %s48 = sadd.s32 %s47, 1
      %s49 = scalar_select %p46, %s47, %s48
      %p52 = pneg %p46
      %p53 = scmp.eq.s32.totalorder %s23, 3
      %p54 = por %p52, %p53
      %p55 = scmp.ne.s32.totalorder %s47, %s50
      %p56 = scmp.eq.s32.totalorder %s23, 0
      %p57 = por %p55, %p56
      %p58 = scmp.ne.s32.totalorder %s47, %s50
      %p59 = scmp.eq.s32.totalorder %s28, 3
      %p60 = por %p58, %p59
      %p61 = scmp.ne.s32.totalorder %s50, %s51
      %p62 = scmp.eq.s32.totalorder %s28, 0
      %p63 = por %p61, %p62
      %p64 = scmp.ne.s32.totalorder %s50, %s51
      %p65 = scmp.eq.s32.totalorder %s29, 3
      %p66 = por %p64, %p65
      %p68 = scmp.ne.s32.totalorder %s51, %s67
      %p69 = scmp.eq.s32.totalorder %s29, 0
      %p70 = por %p68, %p69
      %s72 = sadd.s32 %s71, 1
      %p75 = scmp.eq.s32.totalorder %s23, 3
      %p76 = scmp.ne.s32.totalorder %s71, %s73
      %p77 = scmp.eq.s32.totalorder %s23, 0
      %p78 = por %p76, %p77
      %p79 = scmp.ne.s32.totalorder %s71, %s73
      %p80 = scmp.eq.s32.totalorder %s28, 3
      %p81 = por %p79, %p80
      %p82 = scmp.ne.s32.totalorder %s73, %s74
      %p83 = scmp.eq.s32.totalorder %s28, 0
      %p84 = por %p82, %p83
      %p85 = scmp.ne.s32.totalorder %s73, %s74
      %p86 = scmp.eq.s32.totalorder %s29, 3
      %p87 = por %p85, %p86
      %p89 = scmp.ne.s32.totalorder %s74, %s88
      %p90 = scmp.eq.s32.totalorder %s29, 0
      %p91 = por %p89, %p90
      %s93 = sadd.s32 %s92, 1
      %p96 = scmp.eq.s32.totalorder %s23, 3
      %p97 = scmp.ne.s32.totalorder %s92, %s94
      %p98 = scmp.eq.s32.totalorder %s23, 0
      %p99 = por %p97, %p98
      %p100 = scmp.ne.s32.totalorder %s92, %s94
      %p101 = scmp.eq.s32.totalorder %s28, 3
      %p102 = por %p100, %p101
      %p103 = scmp.ne.s32.totalorder %s94, %s95
      %p104 = scmp.eq.s32.totalorder %s28, 0
      %p105 = por %p103, %p104
      %p106 = scmp.ne.s32.totalorder %s94, %s95
      %p107 = scmp.eq.s32.totalorder %s29, 3
      %p108 = por %p106, %p107
      %p110 = scmp.ne.s32.totalorder %s95, %s109
      %p111 = scmp.eq.s32.totalorder %s29, 0
      %p112 = por %p110, %p111
      %s113 = ssub.s32 %s30, %s42
      %p114 = scmp.eq.s32.totalorder %s113, 0
      %s116 = sadd.s32 %s115, 1
      %s117 = scalar_select %p114, %s115, %s116
      %p120 = pneg %p114
      %p121 = scmp.eq.s32.totalorder %s23, 3
      %p122 = por %p120, %p121
      %p123 = scmp.ne.s32.totalorder %s115, %s118
      %p124 = scmp.eq.s32.totalorder %s23, 0
      %p125 = por %p123, %p124
      %p126 = scmp.ne.s32.totalorder %s115, %s118
      %p127 = scmp.eq.s32.totalorder %s28, 3
      %p128 = por %p126, %p127
      %p129 = scmp.ne.s32.totalorder %s118, %s119
      %p130 = scmp.eq.s32.totalorder %s28, 0
      %p131 = por %p129, %p130
      %p132 = scmp.ne.s32.totalorder %s118, %s119
      %p133 = scmp.eq.s32.totalorder %s29, 3
      %p134 = por %p132, %p133
      %p136 = scmp.ne.s32.totalorder %s119, %s135
      %p137 = scmp.eq.s32.totalorder %s29, 0
      %p138 = por %p136, %p137
      %s139 = ssub.s32 %s30, %s42
      %p140 = scmp.eq.s32.totalorder %s139, 0
      %s142 = sadd.s32 %s141, 1
      %s143 = scalar_select %p140, %s141, %s142
      %p146 = pneg %p140
      %p147 = scmp.eq.s32.totalorder %s23, 3
      %p148 = por %p146, %p147
      %p149 = scmp.ne.s32.totalorder %s141, %s144
      %p150 = scmp.eq.s32.totalorder %s23, 0
      %p151 = por %p149, %p150
      %p152 = scmp.ne.s32.totalorder %s141, %s144
      %p153 = scmp.eq.s32.totalorder %s28, 3
      %p154 = por %p152, %p153
      %p155 = scmp.ne.s32.totalorder %s144, %s145
      %p156 = scmp.eq.s32.totalorder %s28, 0
      %p157 = por %p155, %p156
      %p158 = scmp.ne.s32.totalorder %s144, %s145
      %p159 = scmp.eq.s32.totalorder %s29, 3
      %p160 = por %p158, %p159
      %p162 = scmp.ne.s32.totalorder %s145, %s161
      %p163 = scmp.eq.s32.totalorder %s29, 0
      %p164 = por %p162, %p163
      %s165 = ssub.s32 %s30, %s42
      %p166 = scmp.eq.s32.totalorder %s165, 0
      %s168 = sadd.s32 %s167, 1
      %s169 = scalar_select %p166, %s167, %s168
      %p172 = pneg %p166
      %p173 = scmp.eq.s32.totalorder %s23, 3
      %p174 = por %p172, %p173
      %p175 = scmp.ne.s32.totalorder %s167, %s170
      %p176 = scmp.eq.s32.totalorder %s23, 0
      %p177 = por %p175, %p176
      %p178 = scmp.ne.s32.totalorder %s167, %s170
      %p179 = scmp.eq.s32.totalorder %s28, 3
      %p180 = por %p178, %p179
      %p181 = scmp.ne.s32.totalorder %s170, %s171
      %p182 = scmp.eq.s32.totalorder %s28, 0
      %p183 = por %p181, %p182
      %p184 = scmp.ne.s32.totalorder %s170, %s171
      %p185 = scmp.eq.s32.totalorder %s29, 3
      %p186 = por %p184, %p185
      %p188 = scmp.ne.s32.totalorder %s171, %s187
      %p189 = scmp.eq.s32.totalorder %s29, 0
      %p190 = por %p188, %p189
      %s191 = ssub.s32 %s30, %s42
      %p192 = scmp.eq.s32.totalorder %s191, 0
      %s194 = sadd.s32 %s193, 1
      %s195 = scalar_select %p192, %s193, %s194
      %p198 = pneg %p192
      %p199 = scmp.eq.s32.totalorder %s23, 3
      %p200 = por %p198, %p199
      %p201 = scmp.ne.s32.totalorder %s193, %s196
      %p202 = scmp.eq.s32.totalorder %s23, 0
      %p203 = por %p201, %p202
      %p204 = scmp.ne.s32.totalorder %s193, %s196
      %p205 = scmp.eq.s32.totalorder %s28, 3
      %p206 = por %p204, %p205
      %p207 = scmp.ne.s32.totalorder %s196, %s197
      %p208 = scmp.eq.s32.totalorder %s28, 0
      %p209 = por %p207, %p208
      %p210 = scmp.ne.s32.totalorder %s196, %s197
      %p211 = scmp.eq.s32.totalorder %s29, 3
      %p212 = por %p210, %p211
      %p214 = scmp.ne.s32.totalorder %s197, %s213
      %p215 = scmp.eq.s32.totalorder %s29, 0
      %p216 = por %p214, %p215
      %p217 = scmp.le.s32.totalorder 1, %s23
      %p218 = scmp.lt.s32.totalorder %s23, 5
      %p219 = pnand %p217, %p218
      %p220 = pneg %p219
      // Predicated region
      $region9: #{tpu_custom_call.1} parent=5 // pred_check
        _
      $region10: #{tpu_custom_call.1} parent=5 // pred_check_branch
        %222 = sbr.rel (%p219) target = $region12
      $region11: #{tpu_custom_call.1} parent=5 // pred_region
        %s223 = ssub.s32 %s23, 1
        // Predicated region
        $region13: #{tpu_custom_call.1} parent=11 // pred_check
          %p224 = pneg %p84
        $region14: #{tpu_custom_call.1} parent=11 // pred_check_branch
          %226 = sbr.rel (%p224) target = $region16
        $region15: #{tpu_custom_call.1} parent=11 // pred_region
          %228 = vsyncadd [#allocation7], 0
          %s229 = sshll.u32 %s1, 4
          %s230 = int_to_ptr.hbm [resolvable:$true] %s229
          %s231 = sshll.u32 [#allocation6], 4
          %s232 = int_to_ptr.vmem [resolvable:$true] %s231
          %237 = dma.hbm_to_vmem [thread:$0]  %s230, 2048, %s232, [#allocation7], 128, 128, 8
        $region16: #{tpu_custom_call.1} parent=11 // pred_fallthru
          _
        // Predicated region
        $region17: #{tpu_custom_call.1} parent=11 // pred_check
          %p238 = pneg %p105
        $region18: #{tpu_custom_call.1} parent=11 // pred_check_branch
          %240 = sbr.rel (%p238) target = $region20
        $region19: #{tpu_custom_call.1} parent=11 // pred_region
          _
        $region20: #{tpu_custom_call.1} parent=11 // pred_fallthru
          _
      $region12: #{tpu_custom_call.1} parent=5 // pred_fallthru
        _
      %p241 = scmp.lt.s32.totalorder %s23, 4
      // Predicated region
      $region21: #{tpu_custom_call.1} parent=5 // pred_check
        %p242 = pneg %p241
      $region22: #{tpu_custom_call.1} parent=5 // pred_check_branch
        %244 = sbr.rel (%p242) target = $region24
      $region23: #{tpu_custom_call.1} parent=5 // pred_region
        // Predicated region
        $region25: #{tpu_custom_call.1} parent=23 // pred_check
          %p245 = pneg %p57
        $region26: #{tpu_custom_call.1} parent=23 // pred_check_branch
          %247 = sbr.rel (%p245) target = $region28
        $region27: #{tpu_custom_call.1} parent=23 // pred_region
          %s248 = sand.u32 %s47, 1
          %s249 = scalar_lea.sflag [#allocation4], %s248
          %s250 = sand.u32 %s47, 1
          %s251 = smul.addr %s250, 64
          %s252 = scalar_lea.vmem [#allocation3], %s251
          %s253 = smul.u32 8, %s30
          %255 = vsyncadd %s249, 0
          %s256 = smul.addr %s253, 2
          %s257 = sadd.s32 %s31, %s256
          %s258 = smul.addr %s257, 8
          %s259 = scalar_lea.hbm %s0, %s258
          %s260 = sshll.u32 %s259, 4
          %s261 = int_to_ptr.hbm [resolvable:$true] %s260
          %s262 = sshll.u32 %s252, 4
          %s263 = int_to_ptr.vmem [resolvable:$true] %s262
          %268 = dma.hbm_to_vmem [thread:$0]  %s261, 1024, %s263, %s249, 256, 128, 8
        $region28: #{tpu_custom_call.1} parent=23 // pred_fallthru
          _
        // Predicated region
        $region29: #{tpu_custom_call.1} parent=23 // pred_check
          %p269 = pneg %p125
        $region30: #{tpu_custom_call.1} parent=23 // pred_check_branch
          %271 = sbr.rel (%p269) target = $region32
        $region31: #{tpu_custom_call.1} parent=23 // pred_region
          %p272 = scmp.lt.s32.totalorder %s30, 1
          %s273 = scalar_select %p272, %s30, 1
          %s274 = smul.addr %s273, 8
          %s275 = scalar_lea.vmem %s3, %s274
        $region32: #{tpu_custom_call.1} parent=23 // pred_fallthru
          _
      $region24: #{tpu_custom_call.1} parent=5 // pred_fallthru
        _
      %p276 = scmp.le.s32.totalorder 1, %s23
      %p277 = scmp.lt.s32.totalorder %s23, 5
      %p278 = pnand %p276, %p277
      %p279 = pneg %p278
      // Predicated region
      $region33: #{tpu_custom_call.1} parent=5 // pred_check
        _
      $region34: #{tpu_custom_call.1} parent=5 // pred_check_branch
        %281 = sbr.rel (%p278) target = $region36
      $region35: #{tpu_custom_call.1} parent=5 // pred_region
        %s282 = ssub.s32 %s23, 1
        %s283 = sand.u32 %s50, 1
        %s284 = scalar_lea.sflag [#allocation4], %s283
        %s285 = sand.u32 %s50, 1
        %s286 = smul.addr %s285, 64
        %s287 = scalar_lea.vmem [#allocation3], %s286
        // Predicated region
        $region37: #{tpu_custom_call.1} parent=35 // pred_check
          %p288 = pneg %p63
        $region38: #{tpu_custom_call.1} parent=35 // pred_check_branch
          %290 = sbr.rel (%p288) target = $region40
        $region39: #{tpu_custom_call.1} parent=35 // pred_region
          %292 = dma.done %s284, 1024
        $region40: #{tpu_custom_call.1} parent=35 // pred_fallthru
          _
        // Predicated region
        $region41: #{tpu_custom_call.1} parent=35 // pred_check
          %p293 = pneg %p84
        $region42: #{tpu_custom_call.1} parent=35 // pred_check_branch
          %295 = sbr.rel (%p293) target = $region44
        $region43: #{tpu_custom_call.1} parent=35 // pred_region
          %297 = dma.done [#allocation7], 2048
        $region44: #{tpu_custom_call.1} parent=35 // pred_fallthru
          _
        %s298 = sand.u32 %s50, 1
        %s299 = scalar_lea.sflag [#allocation4], %s298
        %s300 = sand.u32 %s50, 1
        %s301 = smul.addr %s300, 64
        %s302 = scalar_lea.vmem [#allocation3], %s301
        %p303 = pneg %p63
        %p304 = pneg %p60
        %p305 = pneg %p84
        %p306 = pneg %p81
        %p307 = pneg %p105
        %p308 = pneg %p102
        %p309 = scmp.lt.s32.totalorder %s32, 1
        %s310 = scalar_select %p309, %s32, 1
        %s311 = smul.addr %s310, 8
        %s312 = scalar_lea.vmem %s3, %s311
        %p313 = pneg %p131
        %p314 = pneg %p128
        %p315 = pneg %p157
        %p316 = pneg %p154
        %s317 = sand.u32 %s144, 1
        %s318 = scalar_lea.sflag [#allocation5], %s317
        %s319 = sand.u32 %s144, 1
        %s320 = smul.addr %s319, 8
        %s321 = scalar_lea.vmem [#allocation8], %s320
        %p322 = pneg %p183
        %p323 = pneg %p180
        %s324 = sand.u32 %s170, 1
        %s325 = scalar_lea.sflag [#allocation10], %s324
        %s326 = sand.u32 %s170, 1
        %s327 = smul.addr %s326, 8
        %s328 = scalar_lea.vmem [#allocation9], %s327
        %p329 = pneg %p209
        %p330 = pneg %p206
        %p331 = scmp.lt.s32.totalorder %s32, 1
        %s332 = scalar_select %p331, %s32, 1
        %s333 = smul.addr %s332, 8
        %s334 = scalar_lea.vmem %s6, %s333
        %s335 = smul.u32 8, %s32
        %p336 = scmp.lt.s32.totalorder %s32, 1
        %s337 = scalar_select %p336, %s32, 1
        %s338 = smul.addr %s337, 8
        %s339 = scalar_lea.vmem %s3, %s338
        %p340 = scmp.lt.s32.totalorder %s32, 1
        %s341 = scalar_select %p340, %s32, 1
        %s342 = smul.addr %s341, 8
        %s343 = scalar_lea.vmem %s6, %s342
        %p344 = scmp.eq.s32.totalorder %s33, 0
        // Predicated region
        $region45: #{tpu_custom_call.1} parent=35 // pred_check
          %p345 = pneg %p344
        $region46: #{tpu_custom_call.1} parent=35 // pred_check_branch
          %347 = sbr.rel (%p345) target = $region48
        $region47: #{tpu_custom_call.1} parent=35 // pred_region
          %348 = vst [vmem:[#allocation2] sm:$0xff] 0.0
        $region48: #{tpu_custom_call.1} parent=35 // pred_fallthru
          _
        %v349 = vld [vmem:[#allocation2] sm:$0xff]
        %v350 = vld [vmem:[%s287] sm:$0xff]
        %v351 = vld [vmem:[%s287 + $0x8] sm:$0xff]
        %v352 = vld [vmem:[%s287 + $0x10] sm:$0xff]
        %v353 = vld [vmem:[%s287 + $0x18] sm:$0xff]
        %v354 = vld [vmem:[%s287 + $0x20] sm:$0xff]
        %v355 = vld [vmem:[%s287 + $0x28] sm:$0xff]
        %v356 = vld [vmem:[%s287 + $0x30] sm:$0xff]
        %v357 = vld [vmem:[%s287 + $0x38] sm:$0xff]
        %v358 = vrot.slane %v350, 4
        %v359 = vadd.f32 %v350, %v358
        %v360 = vrot.slane %v359, 2
        %v361 = vadd.f32 %v359, %v360
        %v362 = vrot.slane %v361, 1
        %v363 = vadd.f32 %v361, %v362
        %v364 = vrot.slane %v351, 4
        %v365 = vadd.f32 %v351, %v364
        %v366 = vrot.slane %v365, 2
        %v367 = vadd.f32 %v365, %v366
        %v368 = vrot.slane %v367, 1
        %v369 = vadd.f32 %v367, %v368
        %v370 = vrot.slane %v352, 4
        %v371 = vadd.f32 %v352, %v370
        %v372 = vrot.slane %v371, 2
        %v373 = vadd.f32 %v371, %v372
        %v374 = vrot.slane %v373, 1
        %v375 = vadd.f32 %v373, %v374
        %v376 = vrot.slane %v353, 4
        %v377 = vadd.f32 %v353, %v376
        %v378 = vrot.slane %v377, 2
        %v379 = vadd.f32 %v377, %v378
        %v380 = vrot.slane %v379, 1
        %v381 = vadd.f32 %v379, %v380
        %v382 = vrot.slane %v354, 4
        %v383 = vadd.f32 %v354, %v382
        %v384 = vrot.slane %v383, 2
        %v385 = vadd.f32 %v383, %v384
        %v386 = vrot.slane %v385, 1
        %v387 = vadd.f32 %v385, %v386
        %v388 = vrot.slane %v355, 4
        %v389 = vadd.f32 %v355, %v388
        %v390 = vrot.slane %v389, 2
        %v391 = vadd.f32 %v389, %v390
        %v392 = vrot.slane %v391, 1
        %v393 = vadd.f32 %v391, %v392
        %v394 = vrot.slane %v356, 4
        %v395 = vadd.f32 %v356, %v394
        %v396 = vrot.slane %v395, 2
        %v397 = vadd.f32 %v395, %v396
        %v398 = vrot.slane %v397, 1
        %v399 = vadd.f32 %v397, %v398
        %v400 = vrot.slane %v357, 4
        %v401 = vadd.f32 %v357, %v400
        %v402 = vrot.slane %v401, 2
        %v403 = vadd.f32 %v401, %v402
        %v404 = vrot.slane %v403, 1
        %v405 = vadd.f32 %v403, %v404
        %vm414 = vcmask 1041409
        %v415 = vsel %vm414, %v369, %v363
        %vm416 = vcmask 1042434
        %v417 = vsel %vm416, %v375, %v415
        %vm418 = vcmask 1043459
        %v419 = vsel %vm418, %v381, %v417
        %vm420 = vcmask 1044484
        %v421 = vsel %vm420, %v387, %v419
        %vm422 = vcmask 1045509
        %v423 = vsel %vm422, %v393, %v421
        %vm424 = vcmask 1046534
        %v425 = vsel %vm424, %v399, %v423
        %vm426 = vcmask 1047559
        %v427 = vsel %vm426, %v405, %v425
        %v429 = vadd.f32 %v349, %v427
        %430 = vst [vmem:[#allocation2] sm:$0xff] %v429
        %p431 = scmp.eq.s32.totalorder %s33, 1
        // Predicated region
        $region49: #{tpu_custom_call.1} parent=35 // pred_check
          %p432 = pneg %p431
        $region50: #{tpu_custom_call.1} parent=35 // pred_check_branch
          %434 = sbr.rel (%p432) target = $region52
        $region51: #{tpu_custom_call.1} parent=35 // pred_region
          %v435 = vld [vmem:[#allocation2] sm:$0xff]
          %v436 = vld [vmem:[#allocation6] sm:$0xff]
          %v437 = vld [vmem:[#allocation6 + $0x8] sm:$0xff]
          %v438 = vld [vmem:[#allocation6 + $0x10] sm:$0xff]
          %v439 = vld [vmem:[#allocation6 + $0x18] sm:$0xff]
          %v440 = vld [vmem:[#allocation6 + $0x20] sm:$0xff]
          %v441 = vld [vmem:[#allocation6 + $0x28] sm:$0xff]
          %v442 = vld [vmem:[#allocation6 + $0x30] sm:$0xff]
          %v443 = vld [vmem:[#allocation6 + $0x38] sm:$0xff]
          %v444 = vld [vmem:[#allocation6 + $0x40] sm:$0xff]
          %v445 = vld [vmem:[#allocation6 + $0x48] sm:$0xff]
          %v446 = vld [vmem:[#allocation6 + $0x50] sm:$0xff]
          %v447 = vld [vmem:[#allocation6 + $0x58] sm:$0xff]
          %v448 = vld [vmem:[#allocation6 + $0x60] sm:$0xff]
          %v449 = vld [vmem:[#allocation6 + $0x68] sm:$0xff]
          %v450 = vld [vmem:[#allocation6 + $0x70] sm:$0xff]
          %v451 = vld [vmem:[#allocation6 + $0x78] sm:$0xff]
          %v452 = vld [vmem:[%s2] sm:$0x1]
          %v454 = vperm.slane %v452, 0
          %456 = vmatpush.msra.mxu0 %v451
          %457 = vmatpush.msra.mxu0 %v450
          %458 = vmatpush.msra.mxu0 %v449
          %459 = vmatpush.msra.mxu0 %v448
          %460 = vmatpush.msra.mxu0 %v447
          %461 = vmatpush.msra.mxu0 %v446
          %462 = vmatpush.msra.mxu0 %v445
          %463 = vmatpush.msra.mxu0 %v444
          %464 = vmatpush.msra.mxu0 %v443
          %465 = vmatpush.msra.mxu0 %v442
          %466 = vmatpush.msra.mxu0 %v441
          %467 = vmatpush.msra.mxu0 %v440
          %468 = vmatpush.msra.mxu0 %v439
          %469 = vmatpush.msra.mxu0 %v438
          %470 = vmatpush.msra.mxu0 %v437
          %471 = vmatpush.msra.mxu0 %v436
          %472 = vmatmul.f32.gmra.mxu0 %v435
          %v473 = vpop.f32.mrf.mxu0
          %v474 = vadd.f32 %v454, %v473
          %475 = vdwg.mxu0
          %476 = vst [vmem:[%s321] sm:$0xff] %v474
          %477 = vmax.xlane.f32.xlu0 %v474
          %v478 = vpop.xlane.xlu0 %477
          %v479 = vsub.f32 %v474, %v478
          %v480 = vmul.f32 %v479, 1.442695
          %v481 = vpow.pop %v480
          %482 = vadd.xlane.f32.xlu0 %v481
          %v483 = vpop.xlane.xlu0 %482
          %v484 = vrcp.pop %v483
          %v485 = vmul.f32 %v481, %v484
          %486 = vst [vmem:[%s328] sm:$0xff] %v485
          %v487 = vlog2.pop %v483
          %v488 = vmul.f32 %v487, 0.6931472
          %v489 = vsub.f32 %v479, %v488
          %v490 = vlaneseq
          %v491 = vand.u32 %v490, 127
          %v492 = vld [vmem:[%s339] sm:$0xff]
          %493 = vset.pattern.permute.xlu0 0
          %494 = vperm.xlu0 %493, %v492
          %v495 = vpop.permute.xlu0 %494
          %vm496 = vcmp.eq.s32.totalorder %v491, %v495
          %v497 = vsel %vm496, %v489, 0.0
          %498 = vadd.xlane.f32.xlu0 %v497
          %v499 = vpop.xlane.xlu0 %498
          %v500 = vsub.f32 0.0, %v499
          %vm501 = vcmask 7168
          %502 = vst.msk [vmem:[%s343] sm:$0xff] %vm501, %v500
        $region52: #{tpu_custom_call.1} parent=35 // pred_fallthru
          _
        %s503 = sand.u32 %s144, 1
        %s504 = scalar_lea.sflag [#allocation5], %s503
        %s505 = sand.u32 %s144, 1
        %s506 = smul.addr %s505, 8
        %s507 = scalar_lea.vmem [#allocation8], %s506
        %s508 = sand.u32 %s170, 1
        %s509 = scalar_lea.sflag [#allocation10], %s508
        %s510 = sand.u32 %s170, 1
        %s511 = smul.addr %s510, 8
        %s512 = scalar_lea.vmem [#allocation9], %s511
        %p513 = scmp.lt.s32.totalorder %s32, 1
        %s514 = scalar_select %p513, %s32, 1
        %s515 = smul.addr %s514, 8
        %s516 = scalar_lea.vmem %s6, %s515
        // Predicated region
        $region53: #{tpu_custom_call.1} parent=35 // pred_check
          %p517 = pneg %p154
        $region54: #{tpu_custom_call.1} parent=35 // pred_check_branch
          %519 = sbr.rel (%p517) target = $region56
        $region55: #{tpu_custom_call.1} parent=35 // pred_region
          %521 = vsyncadd %s504, 0
          %s522 = smul.addr %s32, 8
          %s523 = scalar_lea.hbm %s4, %s522
          %s525 = sshll.u32 %s507, 4
          %s526 = int_to_ptr.vmem [resolvable:$true] %s525
          %s527 = sshll.u32 %s523, 4
          %s528 = int_to_ptr.hbm [resolvable:$true] %s527
          %530 = dma.vmem_to_hbm [thread:$0]  %s526, 128, %s528, %s504
        $region56: #{tpu_custom_call.1} parent=35 // pred_fallthru
          _
        // Predicated region
        $region57: #{tpu_custom_call.1} parent=35 // pred_check
          %p531 = pneg %p180
        $region58: #{tpu_custom_call.1} parent=35 // pred_check_branch
          %533 = sbr.rel (%p531) target = $region60
        $region59: #{tpu_custom_call.1} parent=35 // pred_region
          %535 = vsyncadd %s509, 0
          %s536 = smul.addr %s32, 8
          %s537 = scalar_lea.hbm %s5, %s536
          %s539 = sshll.u32 %s512, 4
          %s540 = int_to_ptr.vmem [resolvable:$true] %s539
          %s541 = sshll.u32 %s537, 4
          %s542 = int_to_ptr.hbm [resolvable:$true] %s541
          %544 = dma.vmem_to_hbm [thread:$0]  %s540, 128, %s542, %s509
        $region60: #{tpu_custom_call.1} parent=35 // pred_fallthru
          _
        // Predicated region
        $region61: #{tpu_custom_call.1} parent=35 // pred_check
          %p545 = pneg %p206
        $region62: #{tpu_custom_call.1} parent=35 // pred_check_branch
          %547 = sbr.rel (%p545) target = $region64
        $region63: #{tpu_custom_call.1} parent=35 // pred_region
          _
        $region64: #{tpu_custom_call.1} parent=35 // pred_fallthru
          _
      $region36: #{tpu_custom_call.1} parent=5 // pred_fallthru
        _
      %p548 = scmp.le.s32.totalorder 2, %s23
      // Predicated region
      $region65: #{tpu_custom_call.1} parent=5 // pred_check
        %p549 = pneg %p548
      $region66: #{tpu_custom_call.1} parent=5 // pred_check_branch
        %551 = sbr.rel (%p549) target = $region68
      $region67: #{tpu_custom_call.1} parent=5 // pred_region
        %s552 = ssub.s32 %s23, 2
        // Predicated region
        $region69: #{tpu_custom_call.1} parent=67 // pred_check
          %p553 = pneg %p160
        $region70: #{tpu_custom_call.1} parent=67 // pred_check_branch
          %555 = sbr.rel (%p553) target = $region72
        $region71: #{tpu_custom_call.1} parent=67 // pred_region
          %s556 = sand.u32 %s145, 1
          %s557 = scalar_lea.sflag [#allocation5], %s556
          %s558 = sand.u32 %s145, 1
          %s559 = smul.addr %s558, 8
          %s560 = scalar_lea.vmem [#allocation8], %s559
          %562 = dma.done %s557, 128
        $region72: #{tpu_custom_call.1} parent=67 // pred_fallthru
          _
        // Predicated region
        $region73: #{tpu_custom_call.1} parent=67 // pred_check
          %p563 = pneg %p186
        $region74: #{tpu_custom_call.1} parent=67 // pred_check_branch
          %565 = sbr.rel (%p563) target = $region76
        $region75: #{tpu_custom_call.1} parent=67 // pred_region
          %s566 = sand.u32 %s171, 1
          %s567 = scalar_lea.sflag [#allocation10], %s566
          %s568 = sand.u32 %s171, 1
          %s569 = smul.addr %s568, 8
          %s570 = scalar_lea.vmem [#allocation9], %s569
          %572 = dma.done %s567, 128
        $region76: #{tpu_custom_call.1} parent=67 // pred_fallthru
          _
        // Predicated region
        $region77: #{tpu_custom_call.1} parent=67 // pred_check
          %p573 = pneg %p212
        $region78: #{tpu_custom_call.1} parent=67 // pred_check_branch
          %575 = sbr.rel (%p573) target = $region80
        $region79: #{tpu_custom_call.1} parent=67 // pred_region
          %p576 = scmp.lt.s32.totalorder %s34, 1
          %s577 = scalar_select %p576, %s34, 1
          %s578 = smul.addr %s577, 8
          %s579 = scalar_lea.vmem %s6, %s578
        $region80: #{tpu_custom_call.1} parent=67 // pred_fallthru
          _
      $region68: #{tpu_custom_call.1} parent=5 // pred_fallthru
        _
    $region6: #{tpu_custom_call.1} parent=1 // loop_footer
      %s27 = sadd.s32 1, %s23
    $region7: #{tpu_custom_call.1} parent=1 // loop_footer_branch
      %22 = sbr.rel target = $region3
    $region8: #{tpu_custom_call.1} parent=1 // loop_exit
      _
    %580 = vsyncpa [#allocation4], 1
    %s581 = scalar_lea.sflag [#allocation4], 1
    %582 = vsyncpa %s581, 1
    %583 = vsyncpa [#allocation7], 1
    %584 = vsyncpa [#allocation5], 1
    %s585 = scalar_lea.sflag [#allocation5], 1
    %586 = vsyncpa %s585, 1
    %587 = vsyncpa [#allocation10], 1
    %s588 = scalar_lea.sflag [#allocation10], 1
    %589 = vsyncpa %s588, 1

</llo_original>
